<compile_context>
chip_gen: v7x
topology: tpu7x:2x2x1
jax: 0.10.0
libtpu: 0.0.40
codegen_flags: <defaults>
</compile_context>

<pallas_src>
import jax
import jax.numpy as jnp
from jax import lax
from jax.experimental import pallas as pl
from jax.experimental.pallas import tpu as pltpu
import numpy as np

EPS = 1e-5


def make_block2_kernel(R, Lout, Cin):
    """R = rows per block (= batches_per_block * Lout)."""

    def kernel(x_ref, bn_ref, w_ref, b_ref, o_ref, shift_ref):
        x_pair = x_ref[...]                       # (R, 2*Cin) = [x[2t] | x[2t+1]]
        bn = bn_ref[...]                          # (4, 2*Cin): [s1|s1],[t1|t1],[s2|s2],[t2|t2]

        # --- BatchNorm (folded to scale/shift) + ReLU, both branches (VPU) ---
        y_pair = jnp.maximum(x_pair * bn[0:1, :] + bn[1:2, :], 0.0)            # [y[2t]|y[2t+1]]
        z_even = jnp.maximum(x_pair[:, :Cin] * bn[2:3, :Cin] + bn[3:4, :Cin], 0.0)  # z[2t]

        # --- prev[t] = y[2t-1]: shift the odd half down one row via a small
        #     VMEM scratch; row 0 is the conv's explicit zero padding. ---
        y_odd = y_pair[:, Cin:]
        shift_ref[0:1, :] = jnp.zeros((1, Cin), jnp.float32)
        shift_ref[pl.ds(1, R), :] = y_odd
        prev = shift_ref[pl.ds(0, R), :]
        if R > Lout:
            # several batches in this block: re-zero the left tap at every batch start
            row = lax.broadcasted_iota(jnp.int32, (R, Cin), 0)
            if Lout & (Lout - 1) == 0:
                at_start = (row & (Lout - 1)) == 0
            else:
                at_start = (row % Lout) == 0
            prev = jnp.where(at_start, 0.0, prev)

        # --- single fused MXU matmul:
        #     [y[2t-1] | y[2t] | y[2t+1] | z[2t]] @ [W_k0; W_k1; W_k2; W_1x1] ---
        act = jnp.concatenate([prev, y_pair, z_even], axis=-1)   # (R, 4*Cin)
        out = jnp.dot(act, w_ref[...], preferred_element_type=jnp.float32)
        o_ref[...] = (out + b_ref[...]).astype(o_ref.dtype)

    return kernel


def block2_pallas(x_ncl, params):
    """x_ncl: (N, Cin, L) float32 (PyTorch layout). Returns (N, Cout, Lout) float32."""
    (g1, b1, m1, v1, g2, b2, m2, v2, w_kio, wb, w2_io, w2b) = params
    N, Cin, L = x_ncl.shape
    K, _, Cout = w_kio.shape
    assert K == 3
    # TODO(synk): odd L needs an explicit right-halo mask; module is used with even L here.
    assert L % 2 == 0
    Lout = L // 2

    # ---- wrapper-side layout plumbing (free reshape) + tiny param prep ----
    # NCL -> NLC, then pair adjacent time steps on the lane axis:
    # row (n, t) of x_pair holds [x[n, :, 2t] | x[n, :, 2t+1]].
    x_pair = jnp.transpose(x_ncl, (0, 2, 1)).reshape(N * Lout, 2 * Cin)

    # fold BatchNorm (inference) into per-channel scale/shift, tiled over the pair
    s1 = g1 * lax.rsqrt(v1 + EPS); t1 = b1 - m1 * s1
    s2 = g2 * lax.rsqrt(v2 + EPS); t2 = b2 - m2 * s2
    bn = jnp.stack([jnp.concatenate([s1, s1]), jnp.concatenate([t1, t1]),
                    jnp.concatenate([s2, s2]), jnp.concatenate([t2, t2])])   # (4, 2*Cin)

    # fuse the three k=3 taps and the 1x1 shortcut into one weight + one bias
    w_fused = jnp.concatenate([w_kio[0], w_kio[1], w_kio[2], w2_io], axis=0)  # (4*Cin, Cout)
    b_fused = (wb + w2b)[None, :]                                             # (1, Cout)

    # ---- grid: fat, batch-aligned row blocks (1 block for small batches) ----
    bpb = N
    while bpb > 1 and (N % bpb or bpb * Lout > 1024 or (bpb * Lout) % 8):
        bpb -= 1
    num_blocks = N // bpb
    if num_blocks > 1 and (bpb * Lout) % 8:
        bpb, num_blocks = N, 1        # fall back to one full block (always legal)
    R = bpb * Lout

    flops = 2 * (N * Lout) * (4 * Cin) * Cout
    bytes_accessed = 4 * (x_pair.size + bn.size + w_fused.size + b_fused.size
                          + N * Lout * Cout)

    out_flat = pl.pallas_call(
        make_block2_kernel(R, Lout, Cin),
        out_shape=jax.ShapeDtypeStruct((N * Lout, Cout), jnp.float32),
        grid=(num_blocks,),
        in_specs=[
            pl.BlockSpec((R, 2 * Cin), lambda i: (i, 0)),      # paired activations
            pl.BlockSpec((4, 2 * Cin), lambda i: (0, 0)),      # fused BN scale/shift
            pl.BlockSpec((4 * Cin, Cout), lambda i: (0, 0)),   # fused conv weight
            pl.BlockSpec((1, Cout), lambda i: (0, 0)),         # fused conv bias
        ],
        out_specs=pl.BlockSpec((R, Cout), lambda i: (i, 0)),
        scratch_shapes=[pltpu.VMEM((R + 1, Cin), jnp.float32)],  # 1-row shift buffer
        compiler_params=pltpu.CompilerParams(dimension_semantics=("parallel",)),
        cost_estimate=pl.CostEstimate(flops=flops, transcendentals=0,
                                      bytes_accessed=bytes_accessed),
    )(x_pair, bn, w_fused, b_fused)

    # (N*Lout, Cout) -> (N, Cout, Lout)   (PyTorch NCL output layout)
    return jnp.transpose(out_flat.reshape(N, Lout, Cout), (0, 2, 1))


def reference_forward(x_ncl, params):
    """Pure-JAX reference in PyTorch NCL layout."""
    (g1, b1, m1, v1, g2, b2, m2, v2, w_kio, wb, w2_io, w2b) = params

    def bn(x, g, b, m, v):
        s = g / jnp.sqrt(v + EPS)
        return (x - m[None, :, None]) * s[None, :, None] + b[None, :, None]

    y = jax.nn.relu(bn(x_ncl, g1, b1, m1, v1))
    z = jax.nn.relu(bn(x_ncl, g2, b2, m2, v2))

    W = jnp.transpose(w_kio, (2, 1, 0))             # (Cout, Cin, K)
    W2 = jnp.transpose(w2_io, (1, 0))[:, :, None]   # (Cout, Cin, 1)

    out = lax.conv_general_dilated(y, W, window_strides=(2,), padding=((1, 1),),
                                   dimension_numbers=("NCH", "OIH", "NCH"))
    out = out + wb[None, :, None]
    ident = lax.conv_general_dilated(z, W2, window_strides=(2,), padding=((0, 0),),
                                     dimension_numbers=("NCH", "OIH", "NCH"))
    ident = ident + w2b[None, :, None]
    return out + ident


def init_params(key, inplanes=20, outplanes=20, kernel_size=3):
    ks = jax.random.split(key, 12)
    g1 = 1.0 + 0.1 * jax.random.normal(ks[0], (inplanes,), jnp.float32)
    b1 = 0.1 * jax.random.normal(ks[1], (inplanes,), jnp.float32)
    m1 = 0.1 * jax.random.normal(ks[2], (inplanes,), jnp.float32)
    v1 = 1.0 + 0.1 * jnp.abs(jax.random.normal(ks[3], (inplanes,), jnp.float32))
    g2 = 1.0 + 0.1 * jax.random.normal(ks[4], (inplanes,), jnp.float32)
    b2 = 0.1 * jax.random.normal(ks[5], (inplanes,), jnp.float32)
    m2 = 0.1 * jax.random.normal(ks[6], (inplanes,), jnp.float32)
    v2 = 1.0 + 0.1 * jnp.abs(jax.random.normal(ks[7], (inplanes,), jnp.float32))
    # conv weights stored in kernel layout: (K, Cin, Cout) and (Cin, Cout)
    w_kio = 0.1 * jax.random.normal(ks[8], (kernel_size, inplanes, outplanes), jnp.float32)
    wb = 0.1 * jax.random.normal(ks[9], (outplanes,), jnp.float32)
    w2_io = 0.1 * jax.random.normal(ks[10], (inplanes, outplanes), jnp.float32)
    w2b = 0.1 * jax.random.normal(ks[11], (outplanes,), jnp.float32)
    return (g1, b1, m1, v1, g2, b2, m2, v2, w_kio, wb, w2_io, w2b)


if __name__ == "__main__":
    N, C, L = 2, 20, 16          # inplanes = outplanes = 20 (module defaults)
    key = jax.random.PRNGKey(0)
    kx, kp = jax.random.split(key)

    x_ncl = jax.random.normal(kx, (N, C, L), jnp.float32)   # PyTorch NCL input
    params = init_params(kp, inplanes=C, outplanes=C, kernel_size=3)

    out_ncl = jax.block_until_ready(block2_pallas(x_ncl, params))
    ref = jax.block_until_ready(reference_forward(x_ncl, params))
    np.testing.assert_allclose(np.asarray(out_ncl), np.asarray(ref), rtol=1e-4, atol=1e-4)
    print("KERNEL_OK")
</pallas_src>

<mosaic_0001>
module attributes {stable_mosaic.version = 11 : i64} {
  func.func @kernel(%arg0: i32, %arg1: memref<16x40xf32, #tpu.memory_space<vmem>>, %arg2: memref<4x40xf32, #tpu.memory_space<vmem>>, %arg3: memref<80x20xf32, #tpu.memory_space<vmem>>, %arg4: memref<1x20xf32, #tpu.memory_space<vmem>>, %arg5: memref<16x20xf32, #tpu.memory_space<vmem>>, %arg6: memref<17x20xf32, #tpu.memory_space<vmem>>) attributes {dimension_semantics = [#tpu.dimension_semantics<parallel>], iteration_bounds = array<i64: 1>, scalar_prefetch = 0 : i64, scratch_operands = 1 : i64, tpu.core_type = #tpu.core_type<tc>, window_params = [{transform_indices = @transform_0, window_bounds = array<i64: 16, 40>}, {pipeline_mode = #tpu.pipeline_mode<synchronous>, transform_indices = @transform_1, window_bounds = array<i64: 4, 40>}, {pipeline_mode = #tpu.pipeline_mode<synchronous>, transform_indices = @transform_2, window_bounds = array<i64: 80, 20>}, {pipeline_mode = #tpu.pipeline_mode<synchronous>, transform_indices = @transform_3, window_bounds = array<i64: 1, 20>}, {transform_indices = @transform_4, window_bounds = array<i64: 16, 20>}]} {
    %c0 = arith.constant 0 : index
    %c0_0 = arith.constant 0 : index
    %0 = vector.load %arg1[%c0, %c0_0] : memref<16x40xf32, #tpu.memory_space<vmem>>, vector<16x40xf32>
    %c0_1 = arith.constant 0 : index
    %c0_2 = arith.constant 0 : index
    %1 = vector.load %arg2[%c0_1, %c0_2] : memref<4x40xf32, #tpu.memory_space<vmem>>, vector<4x40xf32>
    %2 = vector.extract_strided_slice %1 {offsets = [0, 0], sizes = [1, 40], strides = [1, 1]} : vector<4x40xf32> to vector<1x40xf32>
    %3 = vector.broadcast %2 : vector<1x40xf32> to vector<16x40xf32>
    %4 = arith.mulf %0, %3 : vector<16x40xf32>
    %5 = vector.extract_strided_slice %1 {offsets = [1, 0], sizes = [1, 40], strides = [1, 1]} : vector<4x40xf32> to vector<1x40xf32>
    %6 = vector.broadcast %5 : vector<1x40xf32> to vector<16x40xf32>
    %7 = arith.addf %4, %6 : vector<16x40xf32>
    %cst = arith.constant 0.000000e+00 : f32
    %8 = vector.broadcast %cst : f32 to vector<16x40xf32>
    %9 = arith.maximumf %7, %8 : vector<16x40xf32>
    %10 = vector.extract_strided_slice %0 {offsets = [0, 0], sizes = [16, 20], strides = [1, 1]} : vector<16x40xf32> to vector<16x20xf32>
    %11 = vector.extract_strided_slice %1 {offsets = [2, 0], sizes = [1, 20], strides = [1, 1]} : vector<4x40xf32> to vector<1x20xf32>
    %12 = vector.broadcast %11 : vector<1x20xf32> to vector<16x20xf32>
    %13 = arith.mulf %10, %12 : vector<16x20xf32>
    %14 = vector.extract_strided_slice %1 {offsets = [3, 0], sizes = [1, 20], strides = [1, 1]} : vector<4x40xf32> to vector<1x20xf32>
    %15 = vector.broadcast %14 : vector<1x20xf32> to vector<16x20xf32>
    %16 = arith.addf %13, %15 : vector<16x20xf32>
    %cst_3 = arith.constant 0.000000e+00 : f32
    %17 = vector.broadcast %cst_3 : f32 to vector<16x20xf32>
    %18 = arith.maximumf %16, %17 : vector<16x20xf32>
    %19 = vector.extract_strided_slice %9 {offsets = [0, 20], sizes = [16, 20], strides = [1, 1]} : vector<16x40xf32> to vector<16x20xf32>
    %cst_4 = arith.constant 0.000000e+00 : f32
    %20 = vector.broadcast %cst_4 : f32 to vector<1x20xf32>
    %c0_5 = arith.constant 0 : index
    %c0_6 = arith.constant 0 : index
    %21 = vector.load %arg6[%c0_5, %c0_6] : memref<17x20xf32, #tpu.memory_space<vmem>>, vector<1x20xf32>
    tpu.vector_store %arg6[%c0_5, %c0_6], %20 {strides = array<i32>} : memref<17x20xf32, #tpu.memory_space<vmem>>, vector<1x20xf32>,
    %c1 = arith.constant 1 : index
    %c0_7 = arith.constant 0 : index
    %22 = vector.load %arg6[%c1, %c0_7] : memref<17x20xf32, #tpu.memory_space<vmem>>, vector<16x20xf32>
    tpu.vector_store %arg6[%c1, %c0_7], %19 {strides = array<i32>} : memref<17x20xf32, #tpu.memory_space<vmem>>, vector<16x20xf32>,
    %c0_8 = arith.constant 0 : index
    %c0_9 = arith.constant 0 : index
    %23 = vector.load %arg6[%c0_8, %c0_9] : memref<17x20xf32, #tpu.memory_space<vmem>>, vector<16x20xf32>
    %24 = tpu.iota {dimensions = array<i32: 0>} : vector<16x20xi32>
    %c7_i32 = arith.constant 7 : i32
    %25 = vector.broadcast %c7_i32 : i32 to vector<16x20xi32>
    %26 = arith.andi %24, %25 : vector<16x20xi32>
    %c0_i32 = arith.constant 0 : i32
    %27 = vector.broadcast %c0_i32 : i32 to vector<16x20xi32>
    %28 = arith.cmpi eq, %26, %27 : vector<16x20xi32>
    %cst_10 = arith.constant 0.000000e+00 : f32
    %29 = vector.broadcast %cst_10 : f32 to vector<16x20xf32>
    %30 = arith.select %28, %29, %23 : vector<16x20xi1>, vector<16x20xf32>
    %31 = tpu.concatenate %30, %9, %18 in 1 : vector<16x20xf32>, vector<16x40xf32>, vector<16x20xf32> -> vector<16x80xf32>
    %c0_11 = arith.constant 0 : index
    %c0_12 = arith.constant 0 : index
    %32 = vector.load %arg3[%c0_11, %c0_12] : memref<80x20xf32, #tpu.memory_space<vmem>>, vector<80x20xf32>
    %cst_13 = arith.constant dense<0.000000e+00> : vector<16x20xf32>
    %33 = tpu.matmul %31, %32, %cst_13 {dimension_numbers = #tpu.dot_dimension_numbers<[1], [0], [0], [1], [0, 0, 1, 1], [], []>} : vector<16x80xf32>, vector<80x20xf32>, vector<16x20xf32> -> vector<16x20xf32>
    %c0_14 = arith.constant 0 : index
    %c0_15 = arith.constant 0 : index
    %34 = vector.load %arg4[%c0_14, %c0_15] : memref<1x20xf32, #tpu.memory_space<vmem>>, vector<1x20xf32>
    %35 = vector.broadcast %34 : vector<1x20xf32> to vector<16x20xf32>
    %36 = arith.addf %33, %35 : vector<16x20xf32>
    %c0_16 = arith.constant 0 : index
    %c0_17 = arith.constant 0 : index
    %37 = vector.load %arg5[%c0_16, %c0_17] : memref<16x20xf32, #tpu.memory_space<vmem>>, vector<16x20xf32>
    tpu.vector_store %arg5[%c0_16, %c0_17], %36 {strides = array<i32>} : memref<16x20xf32, #tpu.memory_space<vmem>>, vector<16x20xf32>,
    return
  }
  func.func @transform_0(%arg0: i32) -> (i32, i32) {
    %c0_i32 = arith.constant 0 : i32
    %c0_i32_0 = arith.constant 0 : i32
    return %arg0, %c0_i32 : i32, i32
  }
  func.func @transform_1(%arg0: i32) -> (i32, i32) {
    %c0_i32 = arith.constant 0 : i32
    %c0_i32_0 = arith.constant 0 : i32
    %c0_i32_1 = arith.constant 0 : i32
    return %c0_i32, %c0_i32_0 : i32, i32
  }
  func.func @transform_2(%arg0: i32) -> (i32, i32) {
    %c0_i32 = arith.constant 0 : i32
    %c0_i32_0 = arith.constant 0 : i32
    %c0_i32_1 = arith.constant 0 : i32
    return %c0_i32, %c0_i32_0 : i32, i32
  }
  func.func @transform_3(%arg0: i32) -> (i32, i32) {
    %c0_i32 = arith.constant 0 : i32
    %c0_i32_0 = arith.constant 0 : i32
    %c0_i32_1 = arith.constant 0 : i32
    return %c0_i32, %c0_i32_0 : i32, i32
  }
  func.func @transform_4(%arg0: i32) -> (i32, i32) {
    %c0_i32 = arith.constant 0 : i32
    %c0_i32_0 = arith.constant 0 : i32
    return %arg0, %c0_i32 : i32, i32
  }
}

</mosaic_0001>

<llo_original>
// kernel: tpu_custom_call.1
$region0: #{tpu_custom_call.1}
  #allocation0 [shape = 'u32[]', space=smem, size = 0x4, offset = 0x4, fixed_abs, tag = 'smem constant byte address 0x4 - core index']
  #allocation1 [shape = 'u32[144,128]{1,0:T(1,128)}', space=vmem, size = 0x12000, scoped, tag = 'internal scratch']
  #allocation2 [shape = 'f32[17,20]{1,0:T(8,128)}', space=vmem, size = 0x3000, scoped, tag = 'scratch operand']
  %s0 = inlined_call_operand.vmem [shape: f32[16,40], index: 0, kind: input, shape index: {}]
  %s1 = inlined_call_operand.vmem [shape: f32[4,40], index: 1, kind: input, shape index: {}]
  %s2 = inlined_call_operand.vmem [shape: f32[80,20], index: 2, kind: input, shape index: {}]
  %s3 = inlined_call_operand.vmem [shape: f32[1,20], index: 3, kind: input, shape index: {}]
  %s4 = inlined_call_operand.hbm [shape: f32[16,20], index: 4, kind: output, shape index: {}]
  %s5 = sld [smem:[#allocation0]]
  $region26: #{tpu_custom_call.1} parent=0
    _
  %s7 = ssub.s32 1, %s5
  %s8 = scalar_select 0, %s7, %s5
  $region1: #{tpu_custom_call.1} parent=0
    #allocation3 [shape = 'u8[8192]{0}', space=vmem, size = 0x2000, scoped, tag = 'output window, operand 0, single buffered']
    #allocation4 [shape = 's32[1]{0}', space=sflag, size = 0x4, scoped, tag = 'scoped memory for tpu_custom_call.1']
    %9 = vsyncpa [#allocation4], 0
    // Predicated region
    $region2: #{tpu_custom_call.1} parent=1 // pred_check
      _
    $region3: #{tpu_custom_call.1} parent=1 // pred_check_branch
      %11 = sbr.rel (0) target = $region5
    $region4: #{tpu_custom_call.1} parent=1 // pred_region
      _
    $region5: #{tpu_custom_call.1} parent=1 // pred_fallthru
      _
    // Predicated region
    $region6: #{tpu_custom_call.1} parent=1 // pred_check
      _
    $region7: #{tpu_custom_call.1} parent=1 // pred_check_branch
      %13 = sbr.rel (0) target = $region9
    $region8: #{tpu_custom_call.1} parent=1 // pred_region
      _
    $region9: #{tpu_custom_call.1} parent=1 // pred_fallthru
      _
    // Predicated region
    $region10: #{tpu_custom_call.1} parent=1 // pred_check
      _
    $region11: #{tpu_custom_call.1} parent=1 // pred_check_branch
      %15 = sbr.rel (0) target = $region13
    $region12: #{tpu_custom_call.1} parent=1 // pred_region
      _
    $region13: #{tpu_custom_call.1} parent=1 // pred_fallthru
      _
    // Predicated region
    $region14: #{tpu_custom_call.1} parent=1 // pred_check
      _
    $region15: #{tpu_custom_call.1} parent=1 // pred_check_branch
      %17 = sbr.rel (0) target = $region17
    $region16: #{tpu_custom_call.1} parent=1 // pred_region
      _
    $region17: #{tpu_custom_call.1} parent=1 // pred_fallthru
      _
    %v18 = vld [vmem:[%s0] sm:$0xff]
    %v19 = vld [vmem:[%s0 + $0x8] sm:$0xff]
    %v20 = vld [vmem:[%s1] sm:$0xf]
    %v21 = vlaneseq
    %v22 = vshrl.u32 %v21, 7
    %v23 = vsub.s32 0, %v22
    %v24 = vrot.slane %v20, %v23
    %v25 = vmul.f32 %v18, %v24
    %v26 = vmul.f32 %v19, %v24
    %v27 = vlaneseq
    %v28 = vshrl.u32 %v27, 7
    %v29 = vsub.s32 1, %v28
    %v30 = vrot.slane %v20, %v29
    %v31 = vadd.f32 %v25, %v30
    %v32 = vadd.f32 %v26, %v30
    %v33 = vmax.f32 %v31, 0.0
    %v34 = vmax.f32 %v32, 0.0
    %v35 = vlaneseq
    %v36 = vshrl.u32 %v35, 7
    %v37 = vsub.s32 2, %v36
    %v38 = vrot.slane %v20, %v37
    %v39 = vmul.f32 %v18, %v38
    %v40 = vmul.f32 %v19, %v38
    %v41 = vlaneseq
    %v42 = vshrl.u32 %v41, 7
    %v43 = vsub.s32 3, %v42
    %v44 = vrot.slane %v20, %v43
    %v45 = vadd.f32 %v39, %v44
    %v46 = vadd.f32 %v40, %v44
    %v47 = vmax.f32 %v45, 0.0
    %v48 = vmax.f32 %v46, 0.0
    %vm49 = vcmask 155648
    %50 = vst.msk [vmem:[#allocation2] sm:$0x1] %vm49, 0.0
    %53 = vrot.lane.b32.xlu0 %v33, 108
    %v54 = vpop.permute.xlu0 %53
    %55 = vrot.lane.b32.xlu0 %v34, 108
    %v56 = vpop.permute.xlu0 %55
    %vm59 = vcmask 162816
    %60 = vst.msk [vmem:[#allocation2 + $0x1] sm:$0xff] %vm59, %v54
    %61 = vst.msk [vmem:[#allocation2 + $0x9] sm:$0xff] %vm59, %v56
    %v62 = vld [vmem:[#allocation2] sm:$0xff]
    %v63 = vld [vmem:[#allocation2 + $0x8] sm:$0xff]
    %v64 = vlaneseq
    %v65 = vshrl.u32 %v64, 7
    %v66 = vadd.s32 %v65, 8
    %v67 = vand.u32 %v65, 7
    %v68 = vand.u32 %v66, 7
    %vm69 = vcmp.eq.s32.totalorder %v67, 0
    %vm70 = vcmp.eq.s32.totalorder %v68, 0
    %v71 = vsel %vm69, 0.0, %v62
    %v72 = vsel %vm70, 0.0, %v63
    %73 = vrot.lane.b32.xlu0 %v33, 20
    %v74 = vpop.permute.xlu0 %73
    %75 = vrot.lane.b32.xlu0 %v34, 20
    %v76 = vpop.permute.xlu0 %75
    %81 = vrot.lane.b32.xlu0 %v47, 60
    %v82 = vpop.permute.xlu0 %81
    %83 = vrot.lane.b32.xlu0 %v48, 60
    %v84 = vpop.permute.xlu0 %83
    %v87 = vsel %vm59, %v71, %v74
    %v88 = vsel %vm59, %v72, %v76
    %vm89 = vcmask 490496
    %v90 = vsel %vm89, %v87, %v82
    %v91 = vsel %vm89, %v88, %v84
    %v92 = vld [vmem:[%s2] sm:$0xff]
    %v93 = vld [vmem:[%s2 + $0x8] sm:$0xff]
    %v94 = vld [vmem:[%s2 + $0x10] sm:$0xff]
    %v95 = vld [vmem:[%s2 + $0x18] sm:$0xff]
    %v96 = vld [vmem:[%s2 + $0x20] sm:$0xff]
    %v97 = vld [vmem:[%s2 + $0x28] sm:$0xff]
    %v98 = vld [vmem:[%s2 + $0x30] sm:$0xff]
    %v99 = vld [vmem:[%s2 + $0x38] sm:$0xff]
    %v100 = vld [vmem:[%s2 + $0x40] sm:$0xff]
    %v101 = vld [vmem:[%s2 + $0x48] sm:$0xff]
    %v102 = vld [vmem:[%s3] sm:$0x1]
    %v104 = vlaneseq
    %v105 = vshrl.u32 %v104, 7
    %v106 = vsub.s32 0, %v105
    %v107 = vrot.slane %v102, %v106
    %vm109 = vcmask 654336
    %v111 = vsel %vm109, %v90, 0
    %v114 = vsel %vm109, %v91, 0
    %116 = vmatprep.subr.mxu0 0.0
    %117 = vmatpush1.msra.mxu0 %v92
    %118 = vmatprep.subr.mxu0 0.0
    %119 = vmatpush1.msra.mxu0 %v93
    %120 = vmatprep.subr.mxu0 0.0
    %121 = vmatpush1.msra.mxu0 %v94
    %122 = vmatprep.subr.mxu0 0.0
    %123 = vmatpush1.msra.mxu0 %v95
    %124 = vmatprep.subr.mxu0 0.0
    %125 = vmatpush1.msra.mxu0 %v96
    %126 = vmatprep.subr.mxu0 0.0
    %127 = vmatpush1.msra.mxu0 %v97
    %128 = vmatprep.subr.mxu0 0.0
    %129 = vmatpush1.msra.mxu0 %v98
    %130 = vmatprep.subr.mxu0 0.0
    %131 = vmatpush1.msra.mxu0 %v99
    %132 = vmatprep.subr.mxu0 0.0
    %133 = vmatpush1.msra.mxu0 %v100
    %134 = vmatprep.subr.mxu0 0.0
    %135 = vmatpush1.msra.mxu0 %v101
    %136 = vmatprep.subr.mxu0 0.0
    %137 = vmatpush1.msra.mxu0 0.0
    %138 = vmatprep.subr.mxu0 0.0
    %139 = vmatpush1.msra.mxu0 0.0
    %140 = vmatprep.subr.mxu0 0.0
    %141 = vmatpush1.msra.mxu0 0.0
    %142 = vmatprep.subr.mxu0 0.0
    %143 = vmatpush1.msra.mxu0 0.0
    %144 = vmatprep.subr.mxu0 0.0
    %145 = vmatpush1.msra.mxu0 0.0
    %146 = vmatprep.subr.mxu0 0.0
    %147 = vmatpush1.msra.mxu0 0.0
    %148 = vmatprep.subr.mxu0 0.0
    %149 = vmatpush1.msra.mxu0 0.0
    %150 = vmatprep.subr.mxu0 0.0
    %151 = vmatpush1.msra.mxu0 0.0
    %152 = vmatprep.subr.mxu0 0.0
    %153 = vmatpush1.msra.mxu0 0.0
    %154 = vmatprep.subr.mxu0 0.0
    %155 = vmatpush1.msra.mxu0 0.0
    %156 = vmatprep.subr.mxu0 0.0
    %157 = vmatpush1.msra.mxu0 0.0
    %158 = vmatprep.subr.mxu0 0.0
    %159 = vmatpush1.msra.mxu0 0.0
    %160 = vmatprep.subr.mxu0 0.0
    %161 = vmatpush1.msra.mxu0 0.0
    %162 = vmatprep.subr.mxu0 0.0
    %163 = vmatpush1.msra.mxu0 0.0
    %164 = vmatprep.subr.mxu0 0.0
    %165 = vmatpush1.msra.mxu0 0.0
    %166 = vmatprep.subr.mxu0 0.0
    %167 = vmatpush1.msra.mxu0 0.0
    %168 = vmatprep.subr.mxu0 0.0
    %169 = vmatpush1.msra.mxu0 0.0
    %170 = vmatprep.subr.mxu0 0.0
    %171 = vmatpush1.msra.mxu0 0.0
    %172 = vmatprep.subr.mxu0 0.0
    %173 = vmatpush1.msra.mxu0 0.0
    %174 = vmatprep.subr.mxu0 0.0
    %175 = vmatpush1.msra.mxu0 0.0
    %176 = vmatprep.subr.mxu0 0.0
    %177 = vmatpush1.msra.mxu0 0.0
    %178 = vmatprep.subr.mxu0 0.0
    %179 = vmatpush1.msra.mxu0 0.0
    %180 = vmatprep.mubr.f32.mxu0 0.0
    %181 = vmatmul.mubr.f32.gmra.mrb[0].mxu0 %v111
    %v182 = vpop.f32.mrb[0].mxu0
    %v183 = vadd.f32 %v107, %v182
    %v184 = vpop.f32.mrb[0].mxu0
    %185 = vmatprep.mubr.f32.mxu0 0.0
    %186 = vmatmul.mubr.f32.gmra.mrb[0].mxu0 %v114
    %v187 = vpop.f32.mrb[0].mxu0
    %v188 = vadd.f32 %v107, %v187
    %v189 = vpop.f32.mrb[0].mxu0
    %190 = vdwg.mxu0
    %191 = vst.msk [vmem:[#allocation3] sm:$0xff] %vm59, %v183
    %192 = vst.msk [vmem:[#allocation3 + $0x8] sm:$0xff] %vm59, %v188
    // Predicated region
    $region18: #{tpu_custom_call.1} parent=1 // pred_check
      _
    $region19: #{tpu_custom_call.1} parent=1 // pred_check_branch
      %194 = sbr.rel (0) target = $region21
    $region20: #{tpu_custom_call.1} parent=1 // pred_region
      %s196 = ssub.s32 256, 256
      %197 = vsyncadd [#allocation4], %s196
      %s198 = sshll.u32 [#allocation3], 4
      %s199 = int_to_ptr.vmem [resolvable:$true] %s198
      %204 = dma.vmem_to_hbm [thread:$0]  %s199, 256, %s4, [#allocation4], 128, 128, 8
    $region21: #{tpu_custom_call.1} parent=1 // pred_fallthru
      _
    // Predicated region
    $region22: #{tpu_custom_call.1} parent=1 // pred_check
      _
    $region23: #{tpu_custom_call.1} parent=1 // pred_check_branch
      %206 = sbr.rel (0) target = $region25
    $region24: #{tpu_custom_call.1} parent=1 // pred_region
      %207 = dma.done [#allocation4], 256
    $region25: #{tpu_custom_call.1} parent=1 // pred_fallthru
      _
    %208 = vsyncpa [#allocation4], 1

</llo_original>
